<compile_context>
chip_gen: v7x
topology: tpu7x:2x2x1
jax: 0.10.0
libtpu: 0.0.40
codegen_flags: <defaults>
</compile_context>

<pallas_src>
import jax
import jax.numpy as jnp
from jax.experimental import pallas as pl
from jax.experimental.pallas import tpu as pltpu


def _round_up(x, m):
    return (x + m - 1) // m * m


# ----------------------------------------------------------------------------
# Index adjustment (vectorized port of the PyTorch adjust_indices).
# Only needed for the element-level reference check; the forward path uses a
# per-edge block scatter instead.
# ----------------------------------------------------------------------------
def adjust_indices_jax(indices, arr_size1, arr_size2):
    """indices: (2, E) int32 graph-level edges -> (rows, cols) flat nnz index arrays."""
    E = indices.shape[1]
    t0 = indices[0][:, None, None]                    # (E, 1, 1)
    t1 = indices[1][:, None, None]                    # (E, 1, 1)
    i = jnp.arange(arr_size1)[None, :, None]          # (1, arr_size1, 1)
    j = jnp.arange(arr_size2)[None, None, :]          # (1, 1, arr_size2)
    rows = jnp.broadcast_to(t0 * arr_size2 + j, (E, arr_size1, arr_size2)).reshape(-1)
    cols = jnp.broadcast_to(t1 * arr_size1 + i, (E, arr_size1, arr_size2)).reshape(-1)
    return rows, cols


# ----------------------------------------------------------------------------
# Pallas kernel: y = x @ W^T + b
# Accumulates directly into the (resident, f32) output tile across the K axis;
# bias is fused into the last K step.
# ----------------------------------------------------------------------------
def _spmm_bias_kernel(x_ref, wt_ref, b_ref, o_ref):
    k = pl.program_id(2)
    part = jnp.dot(x_ref[...], wt_ref[...], preferred_element_type=jnp.float32)

    @pl.when(k == 0)
    def _():
        o_ref[...] = part

    @pl.when(k > 0)
    def _():
        o_ref[...] += part

    @pl.when(k == pl.num_programs(2) - 1)
    def _():
        o_ref[...] += b_ref[...]          # (1, tn) broadcasts over (tb, tn)


def sparse_linear_matmul(x2d, w_t, bias, *, tb=None, tn=None, tk=None):
    """x2d: (B, size1) f32, w_t: (size1, size2) f32 (= W^T), bias: (size2,) f32
    -> (B, size2) f32."""
    B, size1 = x2d.shape
    size2 = w_t.shape[1]

    # Tile defaults (review): large tiles to amortize ~0.35 us/step grid overhead
    # and raise arithmetic intensity.  Lane dims (tn, tk) multiples of 128,
    # sublane dim (tb) multiple of 16 (bf16 packing).
    if tk is None:
        tk = min(1024, _round_up(size1, 128))
    if tn is None:
        tn = min(512, _round_up(size2, 128))
    if tb is None:
        tb = min(512, _round_up(B, 16))
    tk = _round_up(tk, 128)
    tn = _round_up(tn, 128)
    tb = _round_up(tb, 16)

    B_p = _round_up(B, tb)
    size1_p = _round_up(size1, tk)
    size2_p = _round_up(size2, tn)

    # v7x has 2 TensorCores: avoid a degenerate (1 x 1) parallel grid when we can
    # split the batch axis instead.
    if (B_p // tb) * (size2_p // tn) < 2 and tb >= 32:
        tb = _round_up(tb // 2, 16)
        B_p = _round_up(B, tb)

    # Cast to bf16 BEFORE padding (half the pad-copy bytes); f32 accumulation in-kernel.
    x_p = jnp.pad(x2d.astype(jnp.bfloat16), ((0, B_p - B), (0, size1_p - size1)))
    wt_p = jnp.pad(w_t.astype(jnp.bfloat16), ((0, size1_p - size1), (0, size2_p - size2)))
    b_p = jnp.pad(bias.astype(jnp.float32), (0, size2_p - size2)).reshape(1, size2_p)

    grid = (B_p // tb, size2_p // tn, size1_p // tk)

    # Double-buffered VMEM footprint estimate; only raise the scoped limit if a
    # user-selected tiling exceeds the default budget (keeps v7x 64 MiB safe).
    tile_bytes = 2 * (tb * tk * 2 + tk * tn * 2 + tb * tn * 4) + 2 * tn * 4
    cp_kwargs = dict(dimension_semantics=("parallel", "parallel", "arbitrary"))
    if tile_bytes > 24 * 1024 * 1024:
        cp_kwargs["vmem_limit_bytes"] = int(tile_bytes * 1.25)

    y_p = pl.pallas_call(
        _spmm_bias_kernel,
        out_shape=jax.ShapeDtypeStruct((B_p, size2_p), jnp.float32),
        grid_spec=pltpu.PrefetchScalarGridSpec(
            num_scalar_prefetch=0,
            grid=grid,
            in_specs=[
                pl.BlockSpec((tb, tk), lambda i, j, k: (i, k)),      # x tile
                pl.BlockSpec((tk, tn), lambda i, j, k: (k, j)),      # W^T tile
                pl.BlockSpec((1, tn), lambda i, j, k: (0, j)),       # bias tile
            ],
            out_specs=pl.BlockSpec((tb, tn), lambda i, j, k: (i, j)),
        ),
        compiler_params=pltpu.CompilerParams(**cp_kwargs),
    )(x_p, wt_p, b_p)

    return y_p[:B, :size2]


# ----------------------------------------------------------------------------
# Module-equivalent wrapper
# ----------------------------------------------------------------------------
class BayesianSparseLinearPallas:
    def __init__(self, graph_size1, graph_size2, arr_size1, arr_size2, indices, alpha=None):
        self.graph_size1 = graph_size1
        self.graph_size2 = graph_size2
        self.arr_size1 = arr_size1
        self.arr_size2 = arr_size2
        self.size1 = graph_size1 * arr_size1
        self.size2 = graph_size2 * arr_size2
        self.alpha = 1 if alpha is None else alpha

        indices = jnp.asarray(indices, jnp.int32)
        self.t0 = indices[0]          # row-block index in W  (output / size2 axis)
        self.t1 = indices[1]          # col-block index in W  (input  / size1 axis)
        self.num_edges = int(self.t0.shape[0])
        nnz = self.num_edges * arr_size1 * arr_size2

        # Deterministic parameter init (matches nn.Parameter(torch.zeros(...)))
        self.weight_mean = jnp.zeros((nnz,), jnp.float32)
        self.weight_log_var = jnp.zeros((nnz,), jnp.float32)
        self.b_mean = jnp.zeros((self.size2,), jnp.float32)
        self.b_log_var = jnp.zeros((self.size2,), jnp.float32)

    def _densify_wt(self, values):
        """Per-edge block scatter that emits W^T (size1, size2) directly.

        values is ordered (edge, i, j) exactly like the PyTorch adjust_indices
        loop, and W[t0*arr2 + j, t1*arr1 + i] = values[e, i, j], i.e.
        W^T[t1*arr1 + i, t0*arr2 + j] = values[e, i, j].  E block updates instead
        of nnz element updates; duplicates accumulate in f32 (spmm semantics).
        """
        blocks = values.reshape(self.num_edges, self.arr_size1, self.arr_size2)
        wt4 = jnp.zeros((self.graph_size1, self.arr_size1,
                         self.graph_size2, self.arr_size2), jnp.float32)
        wt4 = wt4.at[self.t1, :, self.t0, :].add(blocks)
        return wt4.reshape(self.size1, self.size2)

    def forward(self, x, key, *, tb=None, tn=None, tk=None):
        # x: (B, size1, 1)  (same layout as torch_sparse.spmm's dense operand)
        k_w, k_b = jax.random.split(key)

        # Reparameterized weight / bias sampling (elementwise glue in plain JAX).
        eps_w = jax.random.normal(k_w, self.weight_mean.shape, jnp.float32)
        values = eps_w * jnp.exp(self.weight_log_var) + self.weight_mean
        eps_b = jax.random.normal(k_b, self.b_mean.shape, jnp.float32)
        b = eps_b * jnp.exp(self.b_log_var) + self.b_mean

        w_t = self._densify_wt(values)                         # (size1, size2) f32

        B = x.shape[0]
        x2d = x.reshape(B, self.size1)                         # (B, size1, 1) -> (B, size1)
        y2d = sparse_linear_matmul(x2d, w_t, b, tb=tb, tn=tn, tk=tk)
        y = y2d.reshape(B, self.size2, 1)                      # back to PyTorch layout

        # The PyTorch module computes kl then overwrites it with 0 before returning.
        kl = jnp.float32(0.0)
        return y, self.alpha * kl


# ----------------------------------------------------------------------------
if __name__ == "__main__":
    graph_size1, graph_size2 = 4, 3
    arr_size1, arr_size2 = 64, 48          # size1 = 256, size2 = 144
    # Graph-level edges: row block index in [0, graph_size2), col block in [0, graph_size1).
    # Last edge duplicates (0, 1) to exercise spmm's duplicate-index accumulation.
    indices = jnp.array([[0, 1, 2, 2, 0, 0],
                         [1, 0, 3, 2, 0, 1]], dtype=jnp.int32)

    mod = BayesianSparseLinearPallas(graph_size1, graph_size2, arr_size1, arr_size2,
                                     indices, alpha=None)

    B = 64
    key = jax.random.PRNGKey(0)
    k_x, k_fwd = jax.random.split(key)
    x = jax.random.normal(k_x, (B, mod.size1, 1), jnp.float32)

    # tk=128 -> K grid of 2 (exercises init / accumulate / bias-epilogue paths);
    # the degenerate-parallel-grid heuristic splits the batch axis into 2 tiles.
    y, kl = mod.forward(x, k_fwd, tk=128)
    y = jax.block_until_ready(y)
    kl = jax.block_until_ready(kl)

    # Pure-JAX reference using the ELEMENT-level spmm scatter (same RNG path as
    # forward()); cross-checks the block scatter + kernel against spmm semantics.
    k_w, k_b = jax.random.split(k_fwd)
    eps_w = jax.random.normal(k_w, mod.weight_mean.shape, jnp.float32)
    eps_b = jax.random.normal(k_b, mod.b_mean.shape, jnp.float32)
    values = eps_w * jnp.exp(mod.weight_log_var) + mod.weight_mean
    b = eps_b * jnp.exp(mod.b_log_var) + mod.b_mean
    rows, cols = adjust_indices_jax(indices, arr_size1, arr_size2)
    W = jnp.zeros((mod.size2, mod.size1), jnp.float32).at[rows, cols].add(values)
    x2d = x.reshape(B, mod.size1)

    # Reference with the same bf16 operand quantization the kernel uses (f32 accumulate).
    Wq = W.astype(jnp.bfloat16).astype(jnp.float32)
    xq = x2d.astype(jnp.bfloat16).astype(jnp.float32)
    y_ref = xq @ Wq.T + b[None, :]

    y2d = y.reshape(B, mod.size2)
    assert y.shape == (B, mod.size2, 1)
    assert jnp.allclose(y2d, y_ref, atol=2e-3, rtol=2e-3)
    assert float(kl) == 0.0

    print("KERNEL_OK")
</pallas_src>

<mosaic_0001>
module attributes {stable_mosaic.version = 11 : i64} {
  func.func @_spmm_bias_kernel(%arg0: i32, %arg1: i32, %arg2: i32, %arg3: memref<32x128xbf16, #tpu.memory_space<vmem>>, %arg4: memref<128x256xbf16, #tpu.memory_space<vmem>>, %arg5: memref<1x256xf32, #tpu.memory_space<vmem>>, %arg6: memref<32x256xf32, #tpu.memory_space<vmem>>) attributes {dimension_semantics = [#tpu.dimension_semantics<parallel>, #tpu.dimension_semantics<parallel>, #tpu.dimension_semantics<arbitrary>], iteration_bounds = array<i64: 2, 1, 2>, scalar_prefetch = 0 : i64, scratch_operands = 0 : i64, tpu.core_type = #tpu.core_type<tc>, window_params = [{transform_indices = @transform_0, window_bounds = array<i64: 32, 128>}, {transform_indices = @transform_1, window_bounds = array<i64: 128, 256>}, {transform_indices = @transform_2, window_bounds = array<i64: 1, 256>}, {transform_indices = @transform_3, window_bounds = array<i64: 32, 256>}]} {
    %c0 = arith.constant 0 : index
    %c0_0 = arith.constant 0 : index
    %0 = vector.load %arg3[%c0, %c0_0] : memref<32x128xbf16, #tpu.memory_space<vmem>>, vector<32x128xbf16>
    %c0_1 = arith.constant 0 : index
    %c0_2 = arith.constant 0 : index
    %1 = vector.load %arg4[%c0_1, %c0_2] : memref<128x256xbf16, #tpu.memory_space<vmem>>, vector<128x256xbf16>
    %cst = arith.constant dense<0.000000e+00> : vector<32x256xf32>
    %2 = tpu.matmul %0, %1, %cst {dimension_numbers = #tpu.dot_dimension_numbers<[1], [0], [0], [1], [0, 0, 1, 1], [], []>} : vector<32x128xbf16>, vector<128x256xbf16>, vector<32x256xf32> -> vector<32x256xf32>
    %c0_i32 = arith.constant 0 : i32
    %3 = arith.cmpi eq, %arg2, %c0_i32 : i32
    %4 = arith.extui %3 : i1 to i32
    %c0_i32_3 = arith.constant 0 : i32
    %5 = arith.cmpi ne, %4, %c0_i32_3 : i32
    scf.if %5 {
      %c0_7 = arith.constant 0 : index
      %c0_8 = arith.constant 0 : index
      %12 = vector.load %arg6[%c0_7, %c0_8] : memref<32x256xf32, #tpu.memory_space<vmem>>, vector<32x256xf32>
      tpu.vector_store %arg6[%c0_7, %c0_8], %2 {strides = array<i32>} : memref<32x256xf32, #tpu.memory_space<vmem>>, vector<32x256xf32>,
    } else {
    }
    %c0_i32_4 = arith.constant 0 : i32
    %6 = arith.cmpi sgt, %arg2, %c0_i32_4 : i32
    %7 = arith.extui %6 : i1 to i32
    %c0_i32_5 = arith.constant 0 : i32
    %8 = arith.cmpi ne, %7, %c0_i32_5 : i32
    scf.if %8 {
      %c0_7 = arith.constant 0 : index
      %c0_8 = arith.constant 0 : index
      %12 = vector.load %arg6[%c0_7, %c0_8] : memref<32x256xf32, #tpu.memory_space<vmem>>, vector<32x256xf32>
      %13 = arith.addf %12, %2 : vector<32x256xf32>
      %c0_9 = arith.constant 0 : index
      %c0_10 = arith.constant 0 : index
      %14 = vector.load %arg6[%c0_9, %c0_10] : memref<32x256xf32, #tpu.memory_space<vmem>>, vector<32x256xf32>
      tpu.vector_store %arg6[%c0_9, %c0_10], %13 {strides = array<i32>} : memref<32x256xf32, #tpu.memory_space<vmem>>, vector<32x256xf32>,
    } else {
    }
    %c1_i32 = arith.constant 1 : i32
    %9 = arith.cmpi eq, %arg2, %c1_i32 : i32
    %10 = arith.extui %9 : i1 to i32
    %c0_i32_6 = arith.constant 0 : i32
    %11 = arith.cmpi ne, %10, %c0_i32_6 : i32
    scf.if %11 {
      %c0_7 = arith.constant 0 : index
      %c0_8 = arith.constant 0 : index
      %12 = vector.load %arg6[%c0_7, %c0_8] : memref<32x256xf32, #tpu.memory_space<vmem>>, vector<32x256xf32>
      %c0_9 = arith.constant 0 : index
      %c0_10 = arith.constant 0 : index
      %13 = vector.load %arg5[%c0_9, %c0_10] : memref<1x256xf32, #tpu.memory_space<vmem>>, vector<1x256xf32>
      %14 = vector.broadcast %13 : vector<1x256xf32> to vector<32x256xf32>
      %15 = arith.addf %12, %14 : vector<32x256xf32>
      %c0_11 = arith.constant 0 : index
      %c0_12 = arith.constant 0 : index
      %16 = vector.load %arg6[%c0_11, %c0_12] : memref<32x256xf32, #tpu.memory_space<vmem>>, vector<32x256xf32>
      tpu.vector_store %arg6[%c0_11, %c0_12], %15 {strides = array<i32>} : memref<32x256xf32, #tpu.memory_space<vmem>>, vector<32x256xf32>,
    } else {
    }
    return
  }
  func.func @transform_0(%arg0: i32, %arg1: i32, %arg2: i32) -> (i32, i32) {
    %c0_i32 = arith.constant 0 : i32
    return %arg0, %arg2 : i32, i32
  }
  func.func @transform_1(%arg0: i32, %arg1: i32, %arg2: i32) -> (i32, i32) {
    %c0_i32 = arith.constant 0 : i32
    return %arg2, %arg1 : i32, i32
  }
  func.func @transform_2(%arg0: i32, %arg1: i32, %arg2: i32) -> (i32, i32) {
    %c0_i32 = arith.constant 0 : i32
    %c0_i32_0 = arith.constant 0 : i32
    return %c0_i32, %arg1 : i32, i32
  }
  func.func @transform_3(%arg0: i32, %arg1: i32, %arg2: i32) -> (i32, i32) {
    %c0_i32 = arith.constant 0 : i32
    return %arg0, %arg1 : i32, i32
  }
}

</mosaic_0001>

<llo_original>
// kernel: tpu_custom_call.1
$region0: #{tpu_custom_call.1}
  #allocation0 [shape = 'u32[]', space=smem, size = 0x4, offset = 0x4, fixed_abs, tag = 'smem constant byte address 0x4 - core index']
  #allocation1 [shape = 'u32[144,128]{1,0:T(1,128)}', space=vmem, size = 0x12000, scoped, tag = 'internal scratch']
  %s0 = inlined_call_operand.hbm [shape: bf16[64,256], index: 0, kind: input, shape index: {}]
  %s1 = inlined_call_operand.hbm [shape: bf16[256,256], index: 1, kind: input, shape index: {}]
  %s2 = inlined_call_operand.vmem [shape: f32[1,256], index: 2, kind: input, shape index: {}]
  %s3 = inlined_call_operand.hbm [shape: f32[64,256], index: 3, kind: output, shape index: {}]
  %s4 = sld [smem:[#allocation0]]
  $region65: #{tpu_custom_call.1} parent=0
    _
  %s6 = ssub.s32 1, %s4
  %s7 = scalar_select 0, %s6, %s4
  $region1: #{tpu_custom_call.1} parent=0
    #allocation2 [shape = 'u8[16384]{0}', space=vmem, size = 0x4000, scoped, tag = 'input window, operand 0']
    #allocation3 [shape = 's32[2]{0}', space=sflag, size = 0x8, scoped, tag = 'scoped memory for tpu_custom_call.1']
    #allocation4 [shape = 's32[2]{0}', space=sflag, size = 0x8, scoped, tag = 'scoped memory for tpu_custom_call.1']
    #allocation5 [shape = 'u8[131072]{0}', space=vmem, size = 0x20000, scoped, tag = 'input window, operand 1']
    #allocation6 [shape = 's32[2]{0}', space=sflag, size = 0x8, scoped, tag = 'scoped memory for tpu_custom_call.1']
    #allocation7 [shape = 'u8[65536]{0}', space=vmem, size = 0x10000, scoped, tag = 'output window, operand 0']
    %8 = vsyncpa [#allocation3], 0
    %s9 = scalar_lea.sflag [#allocation3], 1
    %10 = vsyncpa %s9, 0
    %11 = vsyncpa [#allocation6], 0
    %s12 = scalar_lea.sflag [#allocation6], 1
    %13 = vsyncpa %s12, 0
    %14 = vsyncpa [#allocation4], 0
    %s15 = scalar_lea.sflag [#allocation4], 1
    %16 = vsyncpa %s15, 0
    loop: start=0, step=1, limit=6
    $region2: #{tpu_custom_call.1} parent=1 // loop_pre_header
      _
    $region3: #{tpu_custom_call.1} parent=1 // loop_header
      %s18 = sphi 0, %s22
      %p19 = scmp.ge.s32.totalorder %s18, 6
      %s25 = sphi 0, %s44
      %s26 = sphi 0, %s40
      %s27 = sphi 0, %s36
      %s28 = sphi 0, %s25
      %s29 = sphi 0, %s26
      %s30 = sphi 0, %s27
      %s31 = sphi 0, %s28
      %s32 = sphi 0, %s29
      %s33 = sphi 0, %s30
      %s49 = sphi 0, %s51
      %s52 = sphi 0, %s49
      %s53 = sphi 0, %s52
      %s69 = sphi 0, %s53
      %s77 = sphi 0, %s79
      %s80 = sphi 0, %s77
      %s81 = sphi 0, %s80
      %s97 = sphi 0, %s81
      %s103 = sphi 0, %s105
      %s106 = sphi 0, %s103
      %s107 = sphi 0, %s106
      %s123 = sphi 0, %s107
      %s131 = sphi 0, %s133
      %s134 = sphi 0, %s131
      %s135 = sphi 0, %s134
      %s151 = sphi 0, %s135
    $region4: #{tpu_custom_call.1} parent=1 // loop_header_branch
      %21 = sbr.rel (%p19) target = $region8
    $region5: #{tpu_custom_call.1} parent=1 // loop_body
      %s23 = ssub.s32 %s18, 1
      %s24 = ssub.s32 %s18, 2
      %s34 = sadd.s32 1, %s27
      %p35 = scmp.ge.s32.totalorder %s34, 2
      %s36 = scalar_select %p35, 0, %s34
      %s37 = sadd.s32 1, %s26
      %s38 = scalar_select %p35, %s37, %s26
      %p39 = scmp.ge.s32.totalorder %s38, 1
      %s40 = scalar_select %p39, 0, %s38
      %s41 = sadd.s32 1, %s25
      %s42 = scalar_select %p39, %s41, %s25
      %p43 = scmp.ge.s32.totalorder %s42, 2
      %s44 = scalar_select %p43, 0, %s42
      %s45 = ssub.s32 %s25, %s44
      %s46 = ssub.s32 %s27, %s36
      %s47 = sor.u32 %s45, %s46
      %p48 = scmp.eq.s32.totalorder %s47, 0
      %s50 = sadd.s32 %s49, 1
      %s51 = scalar_select %p48, %s49, %s50
      %p54 = pneg %p48
      %p55 = scmp.eq.s32.totalorder %s18, 3
      %p56 = por %p54, %p55
      %p57 = scmp.ne.s32.totalorder %s49, %s52
      %p58 = scmp.eq.s32.totalorder %s18, 0
      %p59 = por %p57, %p58
      %p60 = scmp.ne.s32.totalorder %s49, %s52
      %p61 = scmp.eq.s32.totalorder %s23, 3
      %p62 = por %p60, %p61
      %p63 = scmp.ne.s32.totalorder %s52, %s53
      %p64 = scmp.eq.s32.totalorder %s23, 0
      %p65 = por %p63, %p64
      %p66 = scmp.ne.s32.totalorder %s52, %s53
      %p67 = scmp.eq.s32.totalorder %s24, 3
      %p68 = por %p66, %p67
      %p70 = scmp.ne.s32.totalorder %s53, %s69
      %p71 = scmp.eq.s32.totalorder %s24, 0
      %p72 = por %p70, %p71
      %s73 = ssub.s32 %s27, %s36
      %s74 = ssub.s32 %s26, %s40
      %s75 = sor.u32 %s73, %s74
      %p76 = scmp.eq.s32.totalorder %s75, 0
      %s78 = sadd.s32 %s77, 1
      %s79 = scalar_select %p76, %s77, %s78
      %p82 = pneg %p76
      %p83 = scmp.eq.s32.totalorder %s18, 3
      %p84 = por %p82, %p83
      %p85 = scmp.ne.s32.totalorder %s77, %s80
      %p86 = scmp.eq.s32.totalorder %s18, 0
      %p87 = por %p85, %p86
      %p88 = scmp.ne.s32.totalorder %s77, %s80
      %p89 = scmp.eq.s32.totalorder %s23, 3
      %p90 = por %p88, %p89
      %p91 = scmp.ne.s32.totalorder %s80, %s81
      %p92 = scmp.eq.s32.totalorder %s23, 0
      %p93 = por %p91, %p92
      %p94 = scmp.ne.s32.totalorder %s80, %s81
      %p95 = scmp.eq.s32.totalorder %s24, 3
      %p96 = por %p94, %p95
      %p98 = scmp.ne.s32.totalorder %s81, %s97
      %p99 = scmp.eq.s32.totalorder %s24, 0
      %p100 = por %p98, %p99
      %s101 = ssub.s32 %s26, %s40
      %p102 = scmp.eq.s32.totalorder %s101, 0
      %s104 = sadd.s32 %s103, 1
      %s105 = scalar_select %p102, %s103, %s104
      %p108 = pneg %p102
      %p109 = scmp.eq.s32.totalorder %s18, 3
      %p110 = por %p108, %p109
      %p111 = scmp.ne.s32.totalorder %s103, %s106
      %p112 = scmp.eq.s32.totalorder %s18, 0
      %p113 = por %p111, %p112
      %p114 = scmp.ne.s32.totalorder %s103, %s106
      %p115 = scmp.eq.s32.totalorder %s23, 3
      %p116 = por %p114, %p115
      %p117 = scmp.ne.s32.totalorder %s106, %s107
      %p118 = scmp.eq.s32.totalorder %s23, 0
      %p119 = por %p117, %p118
      %p120 = scmp.ne.s32.totalorder %s106, %s107
      %p121 = scmp.eq.s32.totalorder %s24, 3
      %p122 = por %p120, %p121
      %p124 = scmp.ne.s32.totalorder %s107, %s123
      %p125 = scmp.eq.s32.totalorder %s24, 0
      %p126 = por %p124, %p125
      %s127 = ssub.s32 %s25, %s44
      %s128 = ssub.s32 %s26, %s40
      %s129 = sor.u32 %s127, %s128
      %p130 = scmp.eq.s32.totalorder %s129, 0
      %s132 = sadd.s32 %s131, 1
      %s133 = scalar_select %p130, %s131, %s132
      %p136 = pneg %p130
      %p137 = scmp.eq.s32.totalorder %s18, 3
      %p138 = por %p136, %p137
      %p139 = scmp.ne.s32.totalorder %s131, %s134
      %p140 = scmp.eq.s32.totalorder %s18, 0
      %p141 = por %p139, %p140
      %p142 = scmp.ne.s32.totalorder %s131, %s134
      %p143 = scmp.eq.s32.totalorder %s23, 3
      %p144 = por %p142, %p143
      %p145 = scmp.ne.s32.totalorder %s134, %s135
      %p146 = scmp.eq.s32.totalorder %s23, 0
      %p147 = por %p145, %p146
      %p148 = scmp.ne.s32.totalorder %s134, %s135
      %p149 = scmp.eq.s32.totalorder %s24, 3
      %p150 = por %p148, %p149
      %p152 = scmp.ne.s32.totalorder %s135, %s151
      %p153 = scmp.eq.s32.totalorder %s24, 0
      %p154 = por %p152, %p153
      %p155 = scmp.le.s32.totalorder 1, %s18
      %p156 = scmp.lt.s32.totalorder %s18, 5
      %p157 = pnand %p155, %p156
      %p158 = pneg %p157
      // Predicated region
      $region9: #{tpu_custom_call.1} parent=5 // pred_check
        _
      $region10: #{tpu_custom_call.1} parent=5 // pred_check_branch
        %160 = sbr.rel (%p157) target = $region12
      $region11: #{tpu_custom_call.1} parent=5 // pred_region
        %s161 = ssub.s32 %s18, 1
        // Predicated region
        $region13: #{tpu_custom_call.1} parent=11 // pred_check
          %p162 = pneg %p119
        $region14: #{tpu_custom_call.1} parent=11 // pred_check_branch
          %164 = sbr.rel (%p162) target = $region16
        $region15: #{tpu_custom_call.1} parent=11 // pred_region
          %s165 = smul.u32 2, %s29
          %p166 = scmp.lt.s32.totalorder %s165, 1
          %s167 = scalar_select %p166, %s165, 1
          %s168 = scalar_lea.vmem %s2, %s167
          %s169 = smul.u32 2, %s29
        $region16: #{tpu_custom_call.1} parent=11 // pred_fallthru
          _
      $region12: #{tpu_custom_call.1} parent=5 // pred_fallthru
        _
      %p170 = scmp.lt.s32.totalorder %s18, 4
      // Predicated region
      $region17: #{tpu_custom_call.1} parent=5 // pred_check
        %p171 = pneg %p170
      $region18: #{tpu_custom_call.1} parent=5 // pred_check_branch
        %173 = sbr.rel (%p171) target = $region20
      $region19: #{tpu_custom_call.1} parent=5 // pred_region
        // Predicated region
        $region21: #{tpu_custom_call.1} parent=19 // pred_check
          %p174 = pneg %p59
        $region22: #{tpu_custom_call.1} parent=19 // pred_check_branch
          %176 = sbr.rel (%p174) target = $region24
        $region23: #{tpu_custom_call.1} parent=19 // pred_region
          %s177 = sand.u32 %s49, 1
          %s178 = scalar_lea.sflag [#allocation3], %s177
          %s179 = sand.u32 %s49, 1
          %s180 = smul.addr %s179, 16
          %s181 = scalar_lea.vmem [#allocation2], %s180
          %s182 = smul.u32 4, %s25
          %s184 = ssub.s32 256, 256
          %185 = vsyncadd %s178, %s184
          %s186 = smul.addr %s182, 2
          %s187 = sadd.s32 %s27, %s186
          %s188 = smul.addr %s187, 64
          %s189 = scalar_lea.hbm %s0, %s188
          %s190 = sshll.u32 %s181, 4
          %s191 = int_to_ptr.vmem [resolvable:$true] %s190
          %196 = dma.hbm_to_vmem [thread:$0]  %s189, 256, %s191, %s178, 128, 64, 4
        $region24: #{tpu_custom_call.1} parent=19 // pred_fallthru
          _
        // Predicated region
        $region25: #{tpu_custom_call.1} parent=19 // pred_check
          %p197 = pneg %p87
        $region26: #{tpu_custom_call.1} parent=19 // pred_check_branch
          %199 = sbr.rel (%p197) target = $region28
        $region27: #{tpu_custom_call.1} parent=19 // pred_region
          %s200 = sand.u32 %s77, 1
          %s201 = scalar_lea.sflag [#allocation6], %s200
          %s202 = sand.u32 %s77, 1
          %s203 = smul.addr %s202, 128
          %s204 = scalar_lea.vmem [#allocation5], %s203
          %s205 = smul.u32 16, %s27
          %s206 = smul.u32 2, %s26
          %s208 = ssub.s32 2048, 2048
          %209 = vsyncadd %s201, %s208
          %s210 = smul.addr %s205, 2
          %s211 = sadd.s32 %s206, %s210
          %s212 = smul.addr %s211, 64
          %s213 = scalar_lea.hbm %s1, %s212
          %s214 = sshll.u32 %s204, 4
          %s215 = int_to_ptr.vmem [resolvable:$true] %s214
          %220 = dma.hbm_to_vmem [thread:$0]  %s213, 2048, %s215, %s201, 128, 128, 8
        $region28: #{tpu_custom_call.1} parent=19 // pred_fallthru
          _
      $region20: #{tpu_custom_call.1} parent=5 // pred_fallthru
        _
      %p221 = scmp.le.s32.totalorder 1, %s18
      %p222 = scmp.lt.s32.totalorder %s18, 5
      %p223 = pnand %p221, %p222
      %p224 = pneg %p223
      // Predicated region
      $region29: #{tpu_custom_call.1} parent=5 // pred_check
        _
      $region30: #{tpu_custom_call.1} parent=5 // pred_check_branch
        %226 = sbr.rel (%p223) target = $region32
      $region31: #{tpu_custom_call.1} parent=5 // pred_region
        %s227 = ssub.s32 %s18, 1
        %s228 = sand.u32 %s52, 1
        %s229 = scalar_lea.sflag [#allocation3], %s228
        %s230 = sand.u32 %s52, 1
        %s231 = smul.addr %s230, 16
        %s232 = scalar_lea.vmem [#allocation2], %s231
        // Predicated region
        $region33: #{tpu_custom_call.1} parent=31 // pred_check
          %p233 = pneg %p65
        $region34: #{tpu_custom_call.1} parent=31 // pred_check_branch
          %235 = sbr.rel (%p233) target = $region36
        $region35: #{tpu_custom_call.1} parent=31 // pred_region
          %236 = dma.done %s229, 256
        $region36: #{tpu_custom_call.1} parent=31 // pred_fallthru
          _
        %s237 = sand.u32 %s80, 1
        %s238 = scalar_lea.sflag [#allocation6], %s237
        %s239 = sand.u32 %s80, 1
        %s240 = smul.addr %s239, 128
        %s241 = scalar_lea.vmem [#allocation5], %s240
        // Predicated region
        $region37: #{tpu_custom_call.1} parent=31 // pred_check
          %p242 = pneg %p93
        $region38: #{tpu_custom_call.1} parent=31 // pred_check_branch
          %244 = sbr.rel (%p242) target = $region40
        $region39: #{tpu_custom_call.1} parent=31 // pred_region
          %245 = dma.done %s238, 2048
        $region40: #{tpu_custom_call.1} parent=31 // pred_fallthru
          _
        %s246 = sand.u32 %s52, 1
        %s247 = scalar_lea.sflag [#allocation3], %s246
        %s248 = sand.u32 %s52, 1
        %s249 = smul.addr %s248, 16
        %s250 = scalar_lea.vmem [#allocation2], %s249
        %p251 = pneg %p65
        %p252 = pneg %p62
        %s253 = sand.u32 %s80, 1
        %s254 = scalar_lea.sflag [#allocation6], %s253
        %s255 = sand.u32 %s80, 1
        %s256 = smul.addr %s255, 128
        %s257 = scalar_lea.vmem [#allocation5], %s256
        %p258 = pneg %p93
        %p259 = pneg %p90
        %s260 = smul.u32 2, %s29
        %p261 = scmp.lt.s32.totalorder %s260, 1
        %s262 = scalar_select %p261, %s260, 1
        %s263 = scalar_lea.vmem %s2, %s262
        %p264 = pneg %p119
        %p265 = pneg %p116
        %p266 = pneg %p147
        %p267 = pneg %p144
        %s268 = sand.u32 %s134, 1
        %s269 = scalar_lea.sflag [#allocation4], %s268
        %s270 = sand.u32 %s134, 1
        %s271 = smul.addr %s270, 64
        %s272 = scalar_lea.vmem [#allocation7], %s271
        %s273 = smul.u32 4, %s28
        %s274 = smul.u32 16, %s30
        %s275 = smul.u32 2, %s29
        %s276 = smul.u32 2, %s29
        %p277 = scmp.lt.s32.totalorder %s276, 1
        %s278 = scalar_select %p277, %s276, 1
        %s279 = scalar_lea.vmem %s2, %s278
        %s280 = smul.u32 2, %s29
        %s281 = smul.u32 4, %s28
        %s282 = smul.u32 2, %s29
        %v284 = vld [vmem:[%s232] sm:$0xf]
        %v285 = vld [vmem:[%s232 + $0x4] sm:$0xf]
        %v286 = vld [vmem:[%s232 + $0x8] sm:$0xf]
        %v287 = vld [vmem:[%s232 + $0xc] sm:$0xf]
        %v288 = vld [vmem:[%s241] sm:$0xff]
        %v289 = vld [vmem:[%s241 + $0x8] sm:$0xff]
        %v290 = vld [vmem:[%s241 + $0x10] sm:$0xff]
        %v291 = vld [vmem:[%s241 + $0x18] sm:$0xff]
        %v292 = vld [vmem:[%s241 + $0x20] sm:$0xff]
        %v293 = vld [vmem:[%s241 + $0x28] sm:$0xff]
        %v294 = vld [vmem:[%s241 + $0x30] sm:$0xff]
        %v295 = vld [vmem:[%s241 + $0x38] sm:$0xff]
        %v296 = vld [vmem:[%s241 + $0x40] sm:$0xff]
        %v297 = vld [vmem:[%s241 + $0x48] sm:$0xff]
        %v298 = vld [vmem:[%s241 + $0x50] sm:$0xff]
        %v299 = vld [vmem:[%s241 + $0x58] sm:$0xff]
        %v300 = vld [vmem:[%s241 + $0x60] sm:$0xff]
        %v301 = vld [vmem:[%s241 + $0x68] sm:$0xff]
        %v302 = vld [vmem:[%s241 + $0x70] sm:$0xff]
        %v303 = vld [vmem:[%s241 + $0x78] sm:$0xff]
        %v308 = vunpack.c.l.b16 %v284
        %v309 = vunpack.c.l.b16 %v285
        %v310 = vunpack.c.l.b16 %v286
        %v311 = vunpack.c.l.b16 %v287
        %v312 = vpack.c.b16 %v309, %v308
        %v313 = vpack.c.b16 %v311, %v310
        %v332 = vunpack.c.l.b16 %v288
        %v333 = vunpack.c.h.b16 %v288
        %v334 = vunpack.c.l.b16 %v289
        %v335 = vunpack.c.h.b16 %v289
        %v336 = vunpack.c.l.b16 %v290
        %v337 = vunpack.c.h.b16 %v290
        %v338 = vunpack.c.l.b16 %v291
        %v339 = vunpack.c.h.b16 %v291
        %v340 = vunpack.c.l.b16 %v292
        %v341 = vunpack.c.h.b16 %v292
        %v342 = vunpack.c.l.b16 %v293
        %v343 = vunpack.c.h.b16 %v293
        %v344 = vunpack.c.l.b16 %v294
        %v345 = vunpack.c.h.b16 %v294
        %v346 = vunpack.c.l.b16 %v295
        %v347 = vunpack.c.h.b16 %v295
        %v348 = vunpack.c.l.b16 %v296
        %v349 = vunpack.c.h.b16 %v296
        %v350 = vunpack.c.l.b16 %v297
        %v351 = vunpack.c.h.b16 %v297
        %v352 = vunpack.c.l.b16 %v298
        %v353 = vunpack.c.h.b16 %v298
        %v354 = vunpack.c.l.b16 %v299
        %v355 = vunpack.c.h.b16 %v299
        %v356 = vunpack.c.l.b16 %v300
        %v357 = vunpack.c.h.b16 %v300
        %v358 = vunpack.c.l.b16 %v301
        %v359 = vunpack.c.h.b16 %v301
        %v360 = vunpack.c.l.b16 %v302
        %v361 = vunpack.c.h.b16 %v302
        %v362 = vunpack.c.l.b16 %v303
        %v363 = vunpack.c.h.b16 %v303
        %v364 = vpack.c.b16 %v334, %v332
        %v365 = vpack.c.b16 %v335, %v333
        %v366 = vpack.c.b16 %v338, %v336
        %v367 = vpack.c.b16 %v339, %v337
        %v368 = vpack.c.b16 %v342, %v340
        %v369 = vpack.c.b16 %v343, %v341
        %v370 = vpack.c.b16 %v346, %v344
        %v371 = vpack.c.b16 %v347, %v345
        %v372 = vpack.c.b16 %v350, %v348
        %v373 = vpack.c.b16 %v351, %v349
        %v374 = vpack.c.b16 %v354, %v352
        %v375 = vpack.c.b16 %v355, %v353
        %v376 = vpack.c.b16 %v358, %v356
        %v377 = vpack.c.b16 %v359, %v357
        %v378 = vpack.c.b16 %v362, %v360
        %v379 = vpack.c.b16 %v363, %v361
        %396 = vmatprep.subr.bf16.mxu0 %v365
        %397 = vmatpush1.bf16.msra.mxu0 %v364
        %398 = vmatprep.subr.bf16.mxu0 %v367
        %399 = vmatpush1.bf16.msra.mxu0 %v366
        %400 = vmatprep.subr.bf16.mxu0 %v369
        %401 = vmatpush1.bf16.msra.mxu0 %v368
        %402 = vmatprep.subr.bf16.mxu0 %v371
        %403 = vmatpush1.bf16.msra.mxu0 %v370
        %404 = vmatprep.subr.bf16.mxu0 %v373
        %405 = vmatpush1.bf16.msra.mxu0 %v372
        %406 = vmatprep.subr.bf16.mxu0 %v375
        %407 = vmatpush1.bf16.msra.mxu0 %v374
        %408 = vmatprep.subr.bf16.mxu0 %v377
        %409 = vmatpush1.bf16.msra.mxu0 %v376
        %410 = vmatprep.subr.bf16.mxu0 %v379
        %411 = vmatpush1.bf16.msra.mxu0 %v378
        %412 = vmatprep.subr.bf16.mxu0 0
        %413 = vmatpush1.bf16.msra.mxu0 0
        %414 = vmatprep.subr.bf16.mxu0 0
        %415 = vmatpush1.bf16.msra.mxu0 0
        %416 = vmatprep.subr.bf16.mxu0 0
        %417 = vmatpush1.bf16.msra.mxu0 0
        %418 = vmatprep.subr.bf16.mxu0 0
        %419 = vmatpush1.bf16.msra.mxu0 0
        %420 = vmatprep.subr.bf16.mxu0 0
        %421 = vmatpush1.bf16.msra.mxu0 0
        %422 = vmatprep.subr.bf16.mxu0 0
        %423 = vmatpush1.bf16.msra.mxu0 0
        %424 = vmatprep.subr.bf16.mxu0 0
        %425 = vmatpush1.bf16.msra.mxu0 0
        %426 = vmatprep.subr.bf16.mxu0 0
        %427 = vmatpush1.bf16.msra.mxu0 0
        %428 = vmatprep.mubr.bf16.mxu0 0
        %429 = vmatmul.mubr.bf16.gmra.mrb[0].mxu0 %v312
        %v430 = vpop.f32.mrb[0].mxu0
        %v431 = vadd.f32 0.0, %v430
        %v432 = vpop.f32.mrb[0].mxu0
        %v433 = vadd.f32 0.0, %v432
        %v434 = vpop.f32.mrb[0].mxu0
        %v435 = vadd.f32 0.0, %v434
        %v436 = vpop.f32.mrb[0].mxu0
        %v437 = vadd.f32 0.0, %v436
        %438 = vmatprep.mubr.bf16.mxu0 0
        %439 = vmatmul.mubr.bf16.gmra.mrb[0].mxu0 %v313
        %v440 = vpop.f32.mrb[0].mxu0
        %v441 = vadd.f32 0.0, %v440
        %v442 = vpop.f32.mrb[0].mxu0
        %v443 = vadd.f32 0.0, %v442
        %v444 = vpop.f32.mrb[0].mxu0
        %v445 = vadd.f32 0.0, %v444
        %v446 = vpop.f32.mrb[0].mxu0
        %v447 = vadd.f32 0.0, %v446
        %448 = vdwg.mxu0
        %p449 = scmp.eq.s32.totalorder %s30, 0
        // Predicated region
        $region41: #{tpu_custom_call.1} parent=31 // pred_check
          %p450 = pneg %p449
        $region42: #{tpu_custom_call.1} parent=31 // pred_check_branch
          %452 = sbr.rel (%p450) target = $region44
        $region43: #{tpu_custom_call.1} parent=31 // pred_region
          %453 = vst [vmem:[%s272] sm:$0xff] %v431
          %454 = vst [vmem:[%s272 + $0x8] sm:$0xff] %v433
          %455 = vst [vmem:[%s272 + $0x10] sm:$0xff] %v435
          %456 = vst [vmem:[%s272 + $0x18] sm:$0xff] %v437
          %457 = vst [vmem:[%s272 + $0x20] sm:$0xff] %v441
          %458 = vst [vmem:[%s272 + $0x28] sm:$0xff] %v443
          %459 = vst [vmem:[%s272 + $0x30] sm:$0xff] %v445
          %460 = vst [vmem:[%s272 + $0x38] sm:$0xff] %v447
        $region44: #{tpu_custom_call.1} parent=31 // pred_fallthru
          _
        %p461 = scmp.gt.s32.totalorder %s30, 0
        // Predicated region
        $region45: #{tpu_custom_call.1} parent=31 // pred_check
          %p462 = pneg %p461
        $region46: #{tpu_custom_call.1} parent=31 // pred_check_branch
          %464 = sbr.rel (%p462) target = $region48
        $region47: #{tpu_custom_call.1} parent=31 // pred_region
          %v465 = vld [vmem:[%s272] sm:$0xff]
          %v466 = vld [vmem:[%s272 + $0x8] sm:$0xff]
          %v467 = vld [vmem:[%s272 + $0x10] sm:$0xff]
          %v468 = vld [vmem:[%s272 + $0x18] sm:$0xff]
          %v469 = vld [vmem:[%s272 + $0x20] sm:$0xff]
          %v470 = vld [vmem:[%s272 + $0x28] sm:$0xff]
          %v471 = vld [vmem:[%s272 + $0x30] sm:$0xff]
          %v472 = vld [vmem:[%s272 + $0x38] sm:$0xff]
          %v473 = vadd.f32 %v465, %v431
          %v474 = vadd.f32 %v466, %v433
          %v475 = vadd.f32 %v467, %v435
          %v476 = vadd.f32 %v468, %v437
          %v477 = vadd.f32 %v469, %v441
          %v478 = vadd.f32 %v470, %v443
          %v479 = vadd.f32 %v471, %v445
          %v480 = vadd.f32 %v472, %v447
          %481 = vst [vmem:[%s272] sm:$0xff] %v473
          %482 = vst [vmem:[%s272 + $0x8] sm:$0xff] %v474
          %483 = vst [vmem:[%s272 + $0x10] sm:$0xff] %v475
          %484 = vst [vmem:[%s272 + $0x18] sm:$0xff] %v476
          %485 = vst [vmem:[%s272 + $0x20] sm:$0xff] %v477
          %486 = vst [vmem:[%s272 + $0x28] sm:$0xff] %v478
          %487 = vst [vmem:[%s272 + $0x30] sm:$0xff] %v479
          %488 = vst [vmem:[%s272 + $0x38] sm:$0xff] %v480
        $region48: #{tpu_custom_call.1} parent=31 // pred_fallthru
          _
        %p489 = scmp.eq.s32.totalorder %s30, 1
        // Predicated region
        $region49: #{tpu_custom_call.1} parent=31 // pred_check
          %p490 = pneg %p489
        $region50: #{tpu_custom_call.1} parent=31 // pred_check_branch
          %492 = sbr.rel (%p490) target = $region52
        $region51: #{tpu_custom_call.1} parent=31 // pred_region
          %v493 = vld [vmem:[%s272] sm:$0xff]
          %v494 = vld [vmem:[%s272 + $0x8] sm:$0xff]
          %v495 = vld [vmem:[%s272 + $0x10] sm:$0xff]
          %v496 = vld [vmem:[%s272 + $0x18] sm:$0xff]
          %v497 = vld [vmem:[%s272 + $0x20] sm:$0xff]
          %v498 = vld [vmem:[%s272 + $0x28] sm:$0xff]
          %v499 = vld [vmem:[%s272 + $0x30] sm:$0xff]
          %v500 = vld [vmem:[%s272 + $0x38] sm:$0xff]
          %v501 = vld [vmem:[%s279] sm:$0x3]
          %v503 = vlaneseq
          %v504 = vshrl.u32 %v503, 7
          %v505 = vsub.s32 0, %v504
          %v506 = vrot.slane %v501, %v505
          %v507 = vlaneseq
          %v508 = vshrl.u32 %v507, 7
          %v509 = vsub.s32 1, %v508
          %v510 = vrot.slane %v501, %v509
          %v513 = vadd.f32 %v493, %v506
          %v514 = vadd.f32 %v494, %v510
          %v515 = vadd.f32 %v495, %v506
          %v516 = vadd.f32 %v496, %v510
          %v517 = vadd.f32 %v497, %v506
          %v518 = vadd.f32 %v498, %v510
          %v519 = vadd.f32 %v499, %v506
          %v520 = vadd.f32 %v500, %v510
          %521 = vst [vmem:[%s272] sm:$0xff] %v513
          %522 = vst [vmem:[%s272 + $0x8] sm:$0xff] %v514
          %523 = vst [vmem:[%s272 + $0x10] sm:$0xff] %v515
          %524 = vst [vmem:[%s272 + $0x18] sm:$0xff] %v516
          %525 = vst [vmem:[%s272 + $0x20] sm:$0xff] %v517
          %526 = vst [vmem:[%s272 + $0x28] sm:$0xff] %v518
          %527 = vst [vmem:[%s272 + $0x30] sm:$0xff] %v519
          %528 = vst [vmem:[%s272 + $0x38] sm:$0xff] %v520
        $region52: #{tpu_custom_call.1} parent=31 // pred_fallthru
          _
        %s529 = sand.u32 %s134, 1
        %s530 = scalar_lea.sflag [#allocation4], %s529
        %s531 = sand.u32 %s134, 1
        %s532 = smul.addr %s531, 64
        %s533 = scalar_lea.vmem [#allocation7], %s532
        // Predicated region
        $region53: #{tpu_custom_call.1} parent=31 // pred_check
          %p534 = pneg %p144
        $region54: #{tpu_custom_call.1} parent=31 // pred_check_branch
          %536 = sbr.rel (%p534) target = $region56
        $region55: #{tpu_custom_call.1} parent=31 // pred_region
          %s537 = smul.u32 4, %s28
          %s538 = smul.u32 2, %s29
          %s540 = ssub.s32 1024, 1024
          %541 = vsyncadd %s530, %s540
          %s542 = smul.addr %s537, 2
          %s543 = sadd.s32 %s538, %s542
          %s544 = smul.addr %s543, 128
          %s545 = scalar_lea.hbm %s3, %s544
          %s546 = sshll.u32 %s533, 4
          %s547 = int_to_ptr.vmem [resolvable:$true] %s546
          %552 = dma.vmem_to_hbm [thread:$0]  %s547, 1024, %s545, %s530, 256, 256, 16
        $region56: #{tpu_custom_call.1} parent=31 // pred_fallthru
          _
      $region32: #{tpu_custom_call.1} parent=5 // pred_fallthru
        _
      %p553 = scmp.le.s32.totalorder 2, %s18
      // Predicated region
      $region57: #{tpu_custom_call.1} parent=5 // pred_check
        %p554 = pneg %p553
      $region58: #{tpu_custom_call.1} parent=5 // pred_check_branch
        %556 = sbr.rel (%p554) target = $region60
      $region59: #{tpu_custom_call.1} parent=5 // pred_region
        %s557 = ssub.s32 %s18, 2
        // Predicated region
        $region61: #{tpu_custom_call.1} parent=59 // pred_check
          %p558 = pneg %p150
        $region62: #{tpu_custom_call.1} parent=59 // pred_check_branch
          %560 = sbr.rel (%p558) target = $region64
        $region63: #{tpu_custom_call.1} parent=59 // pred_region
          %s561 = sand.u32 %s135, 1
          %s562 = scalar_lea.sflag [#allocation4], %s561
          %s563 = sand.u32 %s135, 1
          %s564 = smul.addr %s563, 64
          %s565 = scalar_lea.vmem [#allocation7], %s564
          %566 = dma.done %s562, 1024
        $region64: #{tpu_custom_call.1} parent=59 // pred_fallthru
          _
      $region60: #{tpu_custom_call.1} parent=5 // pred_fallthru
        _
    $region6: #{tpu_custom_call.1} parent=1 // loop_footer
      %s22 = sadd.s32 1, %s18
    $region7: #{tpu_custom_call.1} parent=1 // loop_footer_branch
      %17 = sbr.rel target = $region3
    $region8: #{tpu_custom_call.1} parent=1 // loop_exit
      _
    %567 = vsyncpa [#allocation3], 1
    %s568 = scalar_lea.sflag [#allocation3], 1
    %569 = vsyncpa %s568, 1
    %570 = vsyncpa [#allocation6], 1
    %s571 = scalar_lea.sflag [#allocation6], 1
    %572 = vsyncpa %s571, 1
    %573 = vsyncpa [#allocation4], 1
    %s574 = scalar_lea.sflag [#allocation4], 1
    %575 = vsyncpa %s574, 1

</llo_original>
